<compile_context>
chip_gen: v5e
topology: v5e:2x2
jax: 0.10.0
libtpu: 0.0.40
codegen_flags: <defaults>
</compile_context>

<pallas_src>
import functools

import jax
import jax.numpy as jnp
from jax import lax
from jax.experimental import pallas as pl
from jax.experimental.pallas import tpu as pltpu

_CHUNK = 256  # inner column chunk: keeps (32, chunk) activations vreg-resident


# ----------------------------- Pallas kernel -------------------------------
def _mlp_kernel(x_ref, w0_ref, b0_ref, w1_ref, b1_ref, w2_ref, b2_ref,
                out_ref, *, chunk, num_chunks, unroll):
    # Hoist weight/bias loads and bias lane-broadcasts out of the inner loop;
    # they are tiny and stay resident in vregs for the whole grid tile.
    w0 = w0_ref[...]
    w1 = w1_ref[...]
    w2 = w2_ref[...]
    b0 = jnp.broadcast_to(b0_ref[...], (w0.shape[0], chunk))
    b1 = jnp.broadcast_to(b1_ref[...], (w1.shape[0], chunk))
    b2 = jnp.broadcast_to(b2_ref[...], (w2.shape[0], chunk))

    def body(c, carry):
        start = pl.multiple_of(c * chunk, 128)
        x = x_ref[:, pl.ds(start, chunk)]                     # (d_in, chunk)

        # layer 0: Linear(d_in -> h0) + ReLU
        h = jnp.dot(w0, x, preferred_element_type=jnp.float32)
        h = jnp.maximum(h + b0, 0.0)

        # layer 1: Linear(h0 -> h1) + ReLU
        h = jnp.dot(w1, h, preferred_element_type=jnp.float32)
        h = jnp.maximum(h + b1, 0.0)

        # layer 2: Linear(h1 -> d_out), then Tanh
        h = jnp.dot(w2, h, preferred_element_type=jnp.float32)
        out_ref[:, pl.ds(start, chunk)] = jnp.tanh(h + b2).astype(out_ref.dtype)
        return carry

    lax.fori_loop(0, num_chunks, body, 0, unroll=unroll)


# ----------------------------- wrapper --------------------------------------
def _weight_norm(v, g):
    # nn.utils.weight_norm on nn.Linear uses dim=0: per-output-row norm.
    # (matches PyTorch: no epsilon)
    norm = jnp.sqrt(jnp.sum(v * v, axis=1, keepdims=True))
    return g[:, None] * v / norm


def _round_up(x, m):
    return ((x + m - 1) // m) * m


@functools.partial(jax.jit, static_argnames=("tile_n",))
def displacement_network_forward(points, params, tile_n=32768):
    """points: (N, d_in) float32. params: dict of v/g/b per layer."""
    N, d_in = points.shape

    # One-time glue: resolve weight-norm, shape biases for lane broadcast.
    w0 = _weight_norm(params["v0"], params["g0"])
    w1 = _weight_norm(params["v1"], params["g1"])
    w2 = _weight_norm(params["v2"], params["g2"])
    b0 = params["b0"][:, None]
    b1 = params["b1"][:, None]
    b2 = params["b2"][:, None]
    d_out = w2.shape[0]

    # ---- tile sizing (all static under jit) --------------------------------
    n_ceil = _round_up(max(N, 1), _CHUNK)
    # Cap the tile at ~half the problem (rounded to the chunk) so the
    # "parallel" grid axis has >=2 steps whenever N allows -> both v7x
    # TensorCores get work.  Small N collapses to 1-2 tiny blocks.
    half = _round_up((n_ceil + 1) // 2, _CHUNK)
    tile_n_eff = max(_CHUNK, min(_round_up(tile_n, _CHUNK), half))
    num_chunks = tile_n_eff // _CHUNK
    grid = (pl.cdiv(N, tile_n_eff),)

    # Feature-major (lane-dense) layout with N on lanes.  No padding: Pallas
    # clips the boundary block; garbage lanes there only feed garbage output
    # columns, which the clipped output writeback discards.
    # TODO(synk): callers that already hold points feature-major (d_in, N)
    # should pass that layout directly and skip this transpose pass.
    x_t = points.T                                            # (d_in, N)

    kernel = functools.partial(
        _mlp_kernel, chunk=_CHUNK, num_chunks=num_chunks,
        unroll=min(8, num_chunks))

    full = lambda arr: pl.BlockSpec(arr.shape, lambda i: (0, 0))

    out_t = pl.pallas_call(
        kernel,
        out_shape=jax.ShapeDtypeStruct((d_out, N), points.dtype),
        grid_spec=pltpu.PrefetchScalarGridSpec(
            num_scalar_prefetch=0,
            grid=grid,
            in_specs=[
                pl.BlockSpec((d_in, tile_n_eff), lambda i: (0, i)),  # points
                full(w0), full(b0),
                full(w1), full(b1),
                full(w2), full(b2),
            ],
            out_specs=pl.BlockSpec((d_out, tile_n_eff), lambda i: (0, i)),
        ),
        compiler_params=pltpu.CompilerParams(
            dimension_semantics=("parallel",),
            vmem_limit_bytes=32 * 1024 * 1024),
    )(x_t, w0, b0, w1, b1, w2, b2)

    # Back to caller layout (N, d_out).
    return out_t.T


# ----------------------------- reference (pure JAX) --------------------------
def _reference(points, params):
    w0 = _weight_norm(params["v0"], params["g0"])
    w1 = _weight_norm(params["v1"], params["g1"])
    w2 = _weight_norm(params["v2"], params["g2"])
    x = points
    x = jnp.maximum(x @ w0.T + params["b0"], 0.0)
    x = jnp.maximum(x @ w1.T + params["b1"], 0.0)
    x = x @ w2.T + params["b2"]
    return jnp.tanh(x)


# ----------------------------- main -----------------------------------------
if __name__ == "__main__":
    # Module config: DisplacementNetwork(feature_vector_size=256, d_in=3,
    #                d_out=3, dims=[32, 32], weight_norm=True, multires_view=0)
    # multires_view = 0 -> no positional embedding (embed_fn is None).
    d_in, d_out = 3, 3
    dims = [d_in, 32, 32, d_out]   # [d_in] + dims + [d_out]

    key = jax.random.PRNGKey(0)
    ks = jax.random.split(key, 10)

    # Deterministic synthetic parameters (weight-norm parameterisation: v, g, b)
    params = {}
    for l in range(3):
        out_d, in_d = dims[l + 1], dims[l]
        params[f"v{l}"] = 0.1 * jax.random.normal(ks[3 * l + 0], (out_d, in_d),
                                                  jnp.float32)
        params[f"g{l}"] = 1.0 + 0.01 * jax.random.normal(ks[3 * l + 1], (out_d,),
                                                         jnp.float32)
        params[f"b{l}"] = 0.01 * jax.random.normal(ks[3 * l + 2], (out_d,),
                                                   jnp.float32)

    # N values deliberately not multiples of the tile/chunk so the clipped
    # boundary-block path and the multi-chunk inner loop are both exercised.
    for N in (300, 1000):
        pts = jax.random.normal(jax.random.fold_in(ks[9], N), (N, d_in),
                                jnp.float32)
        out = jax.block_until_ready(displacement_network_forward(pts, params))
        ref = _reference(pts, params)
        assert out.shape == (N, d_out)
        assert jnp.allclose(out, ref, atol=1e-5, rtol=1e-5), f"mismatch N={N}"

    print("KERNEL_OK")
</pallas_src>

<mosaic_0001>
module attributes {stable_mosaic.version = 11 : i64} {
  func.func @_mlp_kernel(%arg0: i32, %arg1: memref<3x256xf32, #tpu.memory_space<vmem>>, %arg2: memref<32x3xf32, #tpu.memory_space<vmem>>, %arg3: memref<32x1xf32, #tpu.memory_space<vmem>>, %arg4: memref<32x32xf32, #tpu.memory_space<vmem>>, %arg5: memref<32x1xf32, #tpu.memory_space<vmem>>, %arg6: memref<3x32xf32, #tpu.memory_space<vmem>>, %arg7: memref<3x1xf32, #tpu.memory_space<vmem>>, %arg8: memref<3x256xf32, #tpu.memory_space<vmem>>) attributes {dimension_semantics = [#tpu.dimension_semantics<parallel>], iteration_bounds = array<i64: 2>, scalar_prefetch = 0 : i64, scratch_operands = 0 : i64, tpu.core_type = #tpu.core_type<tc>, window_params = [{transform_indices = @transform_0, window_bounds = array<i64: 3, 256>}, {pipeline_mode = #tpu.pipeline_mode<synchronous>, transform_indices = @transform_1, window_bounds = array<i64: 32, 3>}, {pipeline_mode = #tpu.pipeline_mode<synchronous>, transform_indices = @transform_2, window_bounds = array<i64: 32, 1>}, {pipeline_mode = #tpu.pipeline_mode<synchronous>, transform_indices = @transform_3, window_bounds = array<i64: 32, 32>}, {pipeline_mode = #tpu.pipeline_mode<synchronous>, transform_indices = @transform_4, window_bounds = array<i64: 32, 1>}, {pipeline_mode = #tpu.pipeline_mode<synchronous>, transform_indices = @transform_5, window_bounds = array<i64: 3, 32>}, {pipeline_mode = #tpu.pipeline_mode<synchronous>, transform_indices = @transform_6, window_bounds = array<i64: 3, 1>}, {transform_indices = @transform_7, window_bounds = array<i64: 3, 256>}]} {
    %c0 = arith.constant 0 : index
    %c0_0 = arith.constant 0 : index
    %0 = vector.load %arg2[%c0, %c0_0] : memref<32x3xf32, #tpu.memory_space<vmem>>, vector<32x3xf32>
    %c0_1 = arith.constant 0 : index
    %c0_2 = arith.constant 0 : index
    %1 = vector.load %arg4[%c0_1, %c0_2] : memref<32x32xf32, #tpu.memory_space<vmem>>, vector<32x32xf32>
    %c0_3 = arith.constant 0 : index
    %c0_4 = arith.constant 0 : index
    %2 = vector.load %arg6[%c0_3, %c0_4] : memref<3x32xf32, #tpu.memory_space<vmem>>, vector<3x32xf32>
    %c0_5 = arith.constant 0 : index
    %c0_6 = arith.constant 0 : index
    %3 = vector.load %arg3[%c0_5, %c0_6] : memref<32x1xf32, #tpu.memory_space<vmem>>, vector<32x1xf32>
    %4 = vector.shape_cast %3 : vector<32x1xf32> to vector<32x1xf32>
    %5 = vector.broadcast %4 : vector<32x1xf32> to vector<32x256xf32>
    %c0_7 = arith.constant 0 : index
    %c0_8 = arith.constant 0 : index
    %6 = vector.load %arg5[%c0_7, %c0_8] : memref<32x1xf32, #tpu.memory_space<vmem>>, vector<32x1xf32>
    %7 = vector.shape_cast %6 : vector<32x1xf32> to vector<32x1xf32>
    %8 = vector.broadcast %7 : vector<32x1xf32> to vector<32x256xf32>
    %c0_9 = arith.constant 0 : index
    %c0_10 = arith.constant 0 : index
    %9 = vector.load %arg7[%c0_9, %c0_10] : memref<3x1xf32, #tpu.memory_space<vmem>>, vector<3x1xf32>
    %10 = vector.shape_cast %9 : vector<3x1xf32> to vector<3x1xf32>
    %11 = vector.broadcast %10 : vector<3x1xf32> to vector<3x256xf32>
    %c0_i32 = arith.constant 0 : i32
    %c256_i32 = arith.constant 256 : i32
    %12 = arith.muli %c0_i32, %c256_i32 : i32
    %13 = tpu.assume_multiple %12, 128 : i32
    %c0_11 = arith.constant 0 : index
    %14 = arith.index_cast %13 : i32 to index
    %15 = vector.load %arg1[%c0_11, %14] : memref<3x256xf32, #tpu.memory_space<vmem>>, vector<3x256xf32>
    %cst = arith.constant dense<0.000000e+00> : vector<32x256xf32>
    %16 = tpu.matmul %0, %15, %cst {dimension_numbers = #tpu.dot_dimension_numbers<[1], [0], [0], [1], [0, 0, 1, 1], [], []>} : vector<32x3xf32>, vector<3x256xf32>, vector<32x256xf32> -> vector<32x256xf32>
    %17 = arith.addf %16, %5 : vector<32x256xf32>
    %cst_12 = arith.constant 0.000000e+00 : f32
    %18 = vector.broadcast %cst_12 : f32 to vector<32x256xf32>
    %19 = arith.maximumf %17, %18 : vector<32x256xf32>
    %cst_13 = arith.constant dense<0.000000e+00> : vector<32x256xf32>
    %20 = tpu.matmul %1, %19, %cst_13 {dimension_numbers = #tpu.dot_dimension_numbers<[1], [0], [0], [1], [0, 0, 1, 1], [], []>} : vector<32x32xf32>, vector<32x256xf32>, vector<32x256xf32> -> vector<32x256xf32>
    %21 = arith.addf %20, %8 : vector<32x256xf32>
    %cst_14 = arith.constant 0.000000e+00 : f32
    %22 = vector.broadcast %cst_14 : f32 to vector<32x256xf32>
    %23 = arith.maximumf %21, %22 : vector<32x256xf32>
    %cst_15 = arith.constant dense<0.000000e+00> : vector<3x256xf32>
    %24 = tpu.matmul %2, %23, %cst_15 {dimension_numbers = #tpu.dot_dimension_numbers<[1], [0], [0], [1], [0, 0, 1, 1], [], []>} : vector<3x32xf32>, vector<32x256xf32>, vector<3x256xf32> -> vector<3x256xf32>
    %25 = arith.addf %24, %11 : vector<3x256xf32>
    %26 = math.tanh %25 : vector<3x256xf32>
    %c0_16 = arith.constant 0 : index
    %27 = arith.index_cast %13 : i32 to index
    %28 = vector.load %arg8[%c0_16, %27] : memref<3x256xf32, #tpu.memory_space<vmem>>, vector<3x256xf32>
    tpu.vector_store %arg8[%c0_16, %27], %26 {strides = array<i32>} : memref<3x256xf32, #tpu.memory_space<vmem>>, vector<3x256xf32>,
    %c1_i32 = arith.constant 1 : i32
    return
  }
  func.func @transform_0(%arg0: i32) -> (i32, i32) {
    %c0_i32 = arith.constant 0 : i32
    %c0_i32_0 = arith.constant 0 : i32
    return %c0_i32, %arg0 : i32, i32
  }
  func.func @transform_1(%arg0: i32) -> (i32, i32) {
    %c0_i32 = arith.constant 0 : i32
    %c0_i32_0 = arith.constant 0 : i32
    %c0_i32_1 = arith.constant 0 : i32
    return %c0_i32, %c0_i32_0 : i32, i32
  }
  func.func @transform_2(%arg0: i32) -> (i32, i32) {
    %c0_i32 = arith.constant 0 : i32
    %c0_i32_0 = arith.constant 0 : i32
    %c0_i32_1 = arith.constant 0 : i32
    return %c0_i32, %c0_i32_0 : i32, i32
  }
  func.func @transform_3(%arg0: i32) -> (i32, i32) {
    %c0_i32 = arith.constant 0 : i32
    %c0_i32_0 = arith.constant 0 : i32
    %c0_i32_1 = arith.constant 0 : i32
    return %c0_i32, %c0_i32_0 : i32, i32
  }
  func.func @transform_4(%arg0: i32) -> (i32, i32) {
    %c0_i32 = arith.constant 0 : i32
    %c0_i32_0 = arith.constant 0 : i32
    %c0_i32_1 = arith.constant 0 : i32
    return %c0_i32, %c0_i32_0 : i32, i32
  }
  func.func @transform_5(%arg0: i32) -> (i32, i32) {
    %c0_i32 = arith.constant 0 : i32
    %c0_i32_0 = arith.constant 0 : i32
    %c0_i32_1 = arith.constant 0 : i32
    return %c0_i32, %c0_i32_0 : i32, i32
  }
  func.func @transform_6(%arg0: i32) -> (i32, i32) {
    %c0_i32 = arith.constant 0 : i32
    %c0_i32_0 = arith.constant 0 : i32
    %c0_i32_1 = arith.constant 0 : i32
    return %c0_i32, %c0_i32_0 : i32, i32
  }
  func.func @transform_7(%arg0: i32) -> (i32, i32) {
    %c0_i32 = arith.constant 0 : i32
    %c0_i32_0 = arith.constant 0 : i32
    return %c0_i32, %arg0 : i32, i32
  }
}

</mosaic_0001>

<llo_original>
// kernel: displacement_network_forward.1
$region0: #{displacement_network_forward.1}
  #allocation0 [shape = 'u32[]', space=smem, size = 0x4, offset = 0x4, fixed_abs, tag = 'smem constant byte address 0x4 - core index']
  #allocation1 [shape = 'u32[72,128]{1,0:T(1,128)}', space=vmem, size = 0x9000, scoped, tag = 'internal scratch']
  %s0 = inlined_call_operand.vmem [shape: f32[3,300], index: 0, kind: input, shape index: {}]
  %s1 = inlined_call_operand.vmem [shape: f32[32,3], index: 1, kind: input, shape index: {}]
  %s2 = inlined_call_operand.vmem [shape: f32[32,1], index: 2, kind: input, shape index: {}]
  %s3 = inlined_call_operand.vmem [shape: f32[32,32], index: 3, kind: input, shape index: {}]
  %s4 = inlined_call_operand.vmem [shape: f32[32,1], index: 4, kind: input, shape index: {}]
  %s5 = inlined_call_operand.vmem [shape: f32[3,32], index: 5, kind: input, shape index: {}]
  %s6 = inlined_call_operand.vmem [shape: f32[3,1], index: 6, kind: input, shape index: {}]
  %s7 = inlined_call_operand.hbm [shape: f32[3,300], index: 7, kind: output, shape index: {}]
  %s8 = sld [smem:[#allocation0]]
  $region61: #{displacement_network_forward.1} parent=0
    _
  %s10 = ssub.s32 1, %s8
  %s11 = scalar_select 0, %s10, %s8
  $region1: #{displacement_network_forward.1} parent=0
    #allocation2 [shape = 'u8[8192]{0}', space=vmem, size = 0x2000, scoped, tag = 'output window, operand 0']
    #allocation3 [shape = 's32[2]{0}', space=sflag, size = 0x8, scoped, tag = 'scoped memory for displacement_network_forward.1']
    %12 = vsyncpa [#allocation3], 0
    %s13 = scalar_lea.sflag [#allocation3], 1
    %14 = vsyncpa %s13, 0
    loop: start=0, step=1, limit=4
    $region2: #{displacement_network_forward.1} parent=1 // loop_pre_header
      _
    $region3: #{displacement_network_forward.1} parent=1 // loop_header
      %s16 = sphi 0, %s20
      %p17 = scmp.ge.s32.totalorder %s16, 4
      %s26 = sphi 0, %s28
      %s29 = sphi 0, %s26
      %s30 = sphi 0, %s29
      %s46 = sphi 0, %s30
      %s50 = sphi 0, %s50
      %s52 = sphi 0, %s50
      %s53 = sphi 0, %s52
      %s67 = sphi 0, %s53
      %s71 = sphi 0, %s71
      %s73 = sphi 0, %s71
      %s74 = sphi 0, %s73
      %s88 = sphi 0, %s74
      %s92 = sphi 0, %s92
      %s94 = sphi 0, %s92
      %s95 = sphi 0, %s94
      %s109 = sphi 0, %s95
      %s113 = sphi 0, %s113
      %s115 = sphi 0, %s113
      %s116 = sphi 0, %s115
      %s130 = sphi 0, %s116
      %s134 = sphi 0, %s134
      %s136 = sphi 0, %s134
      %s137 = sphi 0, %s136
      %s151 = sphi 0, %s137
      %s155 = sphi 0, %s155
      %s157 = sphi 0, %s155
      %s158 = sphi 0, %s157
      %s172 = sphi 0, %s158
      %s178 = sphi 0, %s180
      %s181 = sphi 0, %s178
      %s182 = sphi 0, %s181
      %s198 = sphi 0, %s182
    $region4: #{displacement_network_forward.1} parent=1 // loop_header_branch
      %19 = sbr.rel (%p17) target = $region8
    $region5: #{displacement_network_forward.1} parent=1 // loop_body
      %s21 = ssub.s32 %s16, 1
      %s22 = ssub.s32 %s16, 2
      %s23 = sadd.s32 %s16, 1
      %s24 = ssub.s32 %s16, %s23
      %p25 = scmp.eq.s32.totalorder %s24, 0
      %s27 = sadd.s32 %s26, 1
      %s28 = scalar_select %p25, %s26, %s27
      %p31 = pneg %p25
      %p32 = scmp.eq.s32.totalorder %s16, 1
      %p33 = por %p31, %p32
      %p34 = scmp.ne.s32.totalorder %s26, %s29
      %p35 = scmp.eq.s32.totalorder %s16, 0
      %p36 = por %p34, %p35
      %p37 = scmp.ne.s32.totalorder %s26, %s29
      %p38 = scmp.eq.s32.totalorder %s21, 1
      %p39 = por %p37, %p38
      %p40 = scmp.ne.s32.totalorder %s29, %s30
      %p41 = scmp.eq.s32.totalorder %s21, 0
      %p42 = por %p40, %p41
      %p43 = scmp.ne.s32.totalorder %s29, %s30
      %p44 = scmp.eq.s32.totalorder %s22, 1
      %p45 = por %p43, %p44
      %p47 = scmp.ne.s32.totalorder %s30, %s46
      %p48 = scmp.eq.s32.totalorder %s22, 0
      %p49 = por %p47, %p48
      %s51 = sadd.s32 %s50, 1
      %p54 = scmp.eq.s32.totalorder %s16, 1
      %p55 = scmp.ne.s32.totalorder %s50, %s52
      %p56 = scmp.eq.s32.totalorder %s16, 0
      %p57 = por %p55, %p56
      %p58 = scmp.ne.s32.totalorder %s50, %s52
      %p59 = scmp.eq.s32.totalorder %s21, 1
      %p60 = por %p58, %p59
      %p61 = scmp.ne.s32.totalorder %s52, %s53
      %p62 = scmp.eq.s32.totalorder %s21, 0
      %p63 = por %p61, %p62
      %p64 = scmp.ne.s32.totalorder %s52, %s53
      %p65 = scmp.eq.s32.totalorder %s22, 1
      %p66 = por %p64, %p65
      %p68 = scmp.ne.s32.totalorder %s53, %s67
      %p69 = scmp.eq.s32.totalorder %s22, 0
      %p70 = por %p68, %p69
      %s72 = sadd.s32 %s71, 1
      %p75 = scmp.eq.s32.totalorder %s16, 1
      %p76 = scmp.ne.s32.totalorder %s71, %s73
      %p77 = scmp.eq.s32.totalorder %s16, 0
      %p78 = por %p76, %p77
      %p79 = scmp.ne.s32.totalorder %s71, %s73
      %p80 = scmp.eq.s32.totalorder %s21, 1
      %p81 = por %p79, %p80
      %p82 = scmp.ne.s32.totalorder %s73, %s74
      %p83 = scmp.eq.s32.totalorder %s21, 0
      %p84 = por %p82, %p83
      %p85 = scmp.ne.s32.totalorder %s73, %s74
      %p86 = scmp.eq.s32.totalorder %s22, 1
      %p87 = por %p85, %p86
      %p89 = scmp.ne.s32.totalorder %s74, %s88
      %p90 = scmp.eq.s32.totalorder %s22, 0
      %p91 = por %p89, %p90
      %s93 = sadd.s32 %s92, 1
      %p96 = scmp.eq.s32.totalorder %s16, 1
      %p97 = scmp.ne.s32.totalorder %s92, %s94
      %p98 = scmp.eq.s32.totalorder %s16, 0
      %p99 = por %p97, %p98
      %p100 = scmp.ne.s32.totalorder %s92, %s94
      %p101 = scmp.eq.s32.totalorder %s21, 1
      %p102 = por %p100, %p101
      %p103 = scmp.ne.s32.totalorder %s94, %s95
      %p104 = scmp.eq.s32.totalorder %s21, 0
      %p105 = por %p103, %p104
      %p106 = scmp.ne.s32.totalorder %s94, %s95
      %p107 = scmp.eq.s32.totalorder %s22, 1
      %p108 = por %p106, %p107
      %p110 = scmp.ne.s32.totalorder %s95, %s109
      %p111 = scmp.eq.s32.totalorder %s22, 0
      %p112 = por %p110, %p111
      %s114 = sadd.s32 %s113, 1
      %p117 = scmp.eq.s32.totalorder %s16, 1
      %p118 = scmp.ne.s32.totalorder %s113, %s115
      %p119 = scmp.eq.s32.totalorder %s16, 0
      %p120 = por %p118, %p119
      %p121 = scmp.ne.s32.totalorder %s113, %s115
      %p122 = scmp.eq.s32.totalorder %s21, 1
      %p123 = por %p121, %p122
      %p124 = scmp.ne.s32.totalorder %s115, %s116
      %p125 = scmp.eq.s32.totalorder %s21, 0
      %p126 = por %p124, %p125
      %p127 = scmp.ne.s32.totalorder %s115, %s116
      %p128 = scmp.eq.s32.totalorder %s22, 1
      %p129 = por %p127, %p128
      %p131 = scmp.ne.s32.totalorder %s116, %s130
      %p132 = scmp.eq.s32.totalorder %s22, 0
      %p133 = por %p131, %p132
      %s135 = sadd.s32 %s134, 1
      %p138 = scmp.eq.s32.totalorder %s16, 1
      %p139 = scmp.ne.s32.totalorder %s134, %s136
      %p140 = scmp.eq.s32.totalorder %s16, 0
      %p141 = por %p139, %p140
      %p142 = scmp.ne.s32.totalorder %s134, %s136
      %p143 = scmp.eq.s32.totalorder %s21, 1
      %p144 = por %p142, %p143
      %p145 = scmp.ne.s32.totalorder %s136, %s137
      %p146 = scmp.eq.s32.totalorder %s21, 0
      %p147 = por %p145, %p146
      %p148 = scmp.ne.s32.totalorder %s136, %s137
      %p149 = scmp.eq.s32.totalorder %s22, 1
      %p150 = por %p148, %p149
      %p152 = scmp.ne.s32.totalorder %s137, %s151
      %p153 = scmp.eq.s32.totalorder %s22, 0
      %p154 = por %p152, %p153
      %s156 = sadd.s32 %s155, 1
      %p159 = scmp.eq.s32.totalorder %s16, 1
      %p160 = scmp.ne.s32.totalorder %s155, %s157
      %p161 = scmp.eq.s32.totalorder %s16, 0
      %p162 = por %p160, %p161
      %p163 = scmp.ne.s32.totalorder %s155, %s157
      %p164 = scmp.eq.s32.totalorder %s21, 1
      %p165 = por %p163, %p164
      %p166 = scmp.ne.s32.totalorder %s157, %s158
      %p167 = scmp.eq.s32.totalorder %s21, 0
      %p168 = por %p166, %p167
      %p169 = scmp.ne.s32.totalorder %s157, %s158
      %p170 = scmp.eq.s32.totalorder %s22, 1
      %p171 = por %p169, %p170
      %p173 = scmp.ne.s32.totalorder %s158, %s172
      %p174 = scmp.eq.s32.totalorder %s22, 0
      %p175 = por %p173, %p174
      %s176 = ssub.s32 %s16, %s23
      %p177 = scmp.eq.s32.totalorder %s176, 0
      %s179 = sadd.s32 %s178, 1
      %s180 = scalar_select %p177, %s178, %s179
      %p183 = pneg %p177
      %p184 = scmp.eq.s32.totalorder %s16, 1
      %p185 = por %p183, %p184
      %p186 = scmp.ne.s32.totalorder %s178, %s181
      %p187 = scmp.eq.s32.totalorder %s16, 0
      %p188 = por %p186, %p187
      %p189 = scmp.ne.s32.totalorder %s178, %s181
      %p190 = scmp.eq.s32.totalorder %s21, 1
      %p191 = por %p189, %p190
      %p192 = scmp.ne.s32.totalorder %s181, %s182
      %p193 = scmp.eq.s32.totalorder %s21, 0
      %p194 = por %p192, %p193
      %p195 = scmp.ne.s32.totalorder %s181, %s182
      %p196 = scmp.eq.s32.totalorder %s22, 1
      %p197 = por %p195, %p196
      %p199 = scmp.ne.s32.totalorder %s182, %s198
      %p200 = scmp.eq.s32.totalorder %s22, 0
      %p201 = por %p199, %p200
      %p202 = scmp.le.s32.totalorder 1, %s16
      %p203 = scmp.lt.s32.totalorder %s16, 3
      %p204 = pnand %p202, %p203
      %p205 = pneg %p204
      // Predicated region
      $region9: #{displacement_network_forward.1} parent=5 // pred_check
        _
      $region10: #{displacement_network_forward.1} parent=5 // pred_check_branch
        %207 = sbr.rel (%p204) target = $region12
      $region11: #{displacement_network_forward.1} parent=5 // pred_region
        %s208 = ssub.s32 %s16, 1
        // Predicated region
        $region13: #{displacement_network_forward.1} parent=11 // pred_check
          %p209 = pneg %p63
        $region14: #{displacement_network_forward.1} parent=11 // pred_check_branch
          %211 = sbr.rel (%p209) target = $region16
        $region15: #{displacement_network_forward.1} parent=11 // pred_region
          _
        $region16: #{displacement_network_forward.1} parent=11 // pred_fallthru
          _
        // Predicated region
        $region17: #{displacement_network_forward.1} parent=11 // pred_check
          %p212 = pneg %p84
        $region18: #{displacement_network_forward.1} parent=11 // pred_check_branch
          %214 = sbr.rel (%p212) target = $region20
        $region19: #{displacement_network_forward.1} parent=11 // pred_region
          _
        $region20: #{displacement_network_forward.1} parent=11 // pred_fallthru
          _
        // Predicated region
        $region21: #{displacement_network_forward.1} parent=11 // pred_check
          %p215 = pneg %p105
        $region22: #{displacement_network_forward.1} parent=11 // pred_check_branch
          %217 = sbr.rel (%p215) target = $region24
        $region23: #{displacement_network_forward.1} parent=11 // pred_region
          _
        $region24: #{displacement_network_forward.1} parent=11 // pred_fallthru
          _
        // Predicated region
        $region25: #{displacement_network_forward.1} parent=11 // pred_check
          %p218 = pneg %p126
        $region26: #{displacement_network_forward.1} parent=11 // pred_check_branch
          %220 = sbr.rel (%p218) target = $region28
        $region27: #{displacement_network_forward.1} parent=11 // pred_region
          _
        $region28: #{displacement_network_forward.1} parent=11 // pred_fallthru
          _
        // Predicated region
        $region29: #{displacement_network_forward.1} parent=11 // pred_check
          %p221 = pneg %p147
        $region30: #{displacement_network_forward.1} parent=11 // pred_check_branch
          %223 = sbr.rel (%p221) target = $region32
        $region31: #{displacement_network_forward.1} parent=11 // pred_region
          _
        $region32: #{displacement_network_forward.1} parent=11 // pred_fallthru
          _
        // Predicated region
        $region33: #{displacement_network_forward.1} parent=11 // pred_check
          %p224 = pneg %p168
        $region34: #{displacement_network_forward.1} parent=11 // pred_check_branch
          %226 = sbr.rel (%p224) target = $region36
        $region35: #{displacement_network_forward.1} parent=11 // pred_region
          _
        $region36: #{displacement_network_forward.1} parent=11 // pred_fallthru
          _
      $region12: #{displacement_network_forward.1} parent=5 // pred_fallthru
        _
      %p227 = scmp.lt.s32.totalorder %s16, 2
      // Predicated region
      $region37: #{displacement_network_forward.1} parent=5 // pred_check
        %p228 = pneg %p227
      $region38: #{displacement_network_forward.1} parent=5 // pred_check_branch
        %230 = sbr.rel (%p228) target = $region40
      $region39: #{displacement_network_forward.1} parent=5 // pred_region
        // Predicated region
        $region41: #{displacement_network_forward.1} parent=39 // pred_check
          %p231 = pneg %p36
        $region42: #{displacement_network_forward.1} parent=39 // pred_check_branch
          %233 = sbr.rel (%p231) target = $region44
        $region43: #{displacement_network_forward.1} parent=39 // pred_region
          %s234 = smul.u32 2, %s16
          %s235 = ssub.s32 3, %s234
          %p236 = scmp.lt.s32.totalorder %s235, 2
          %s237 = scalar_select %p236, %s235, 2
          %s238 = smul.u32 4, %s237
          %p239 = scmp.lt.s32.totalorder %s234, 2
          %s240 = scalar_select %p239, %s234, 2
          %s241 = smul.addr %s240, 4
          %s242 = scalar_lea.vmem %s0, %s241
          %s243 = smul.u32 2, %s16
          %s244 = ssub.s32 3, %s243
          %p245 = scmp.lt.s32.totalorder %s244, 2
          %s246 = scalar_select %p245, %s244, 2
          %s247 = smul.u32 4, %s246
        $region44: #{displacement_network_forward.1} parent=39 // pred_fallthru
          _
      $region40: #{displacement_network_forward.1} parent=5 // pred_fallthru
        _
      %p248 = scmp.le.s32.totalorder 1, %s16
      %p249 = scmp.lt.s32.totalorder %s16, 3
      %p250 = pnand %p248, %p249
      %p251 = pneg %p250
      // Predicated region
      $region45: #{displacement_network_forward.1} parent=5 // pred_check
        _
      $region46: #{displacement_network_forward.1} parent=5 // pred_check_branch
        %253 = sbr.rel (%p250) target = $region48
      $region47: #{displacement_network_forward.1} parent=5 // pred_region
        %s254 = ssub.s32 %s16, 1
        %s255 = smul.u32 2, %s21
        %s256 = ssub.s32 3, %s255
        %p257 = scmp.lt.s32.totalorder %s256, 2
        %s258 = scalar_select %p257, %s256, 2
        %s259 = smul.u32 4, %s258
        %p260 = scmp.lt.s32.totalorder %s255, 2
        %s261 = scalar_select %p260, %s255, 2
        %s262 = smul.addr %s261, 4
        %s263 = scalar_lea.vmem %s0, %s262
        %p264 = pneg %p42
        %p265 = pneg %p39
        %p266 = pneg %p63
        %p267 = pneg %p60
        %p268 = pneg %p84
        %p269 = pneg %p81
        %p270 = pneg %p105
        %p271 = pneg %p102
        %p272 = pneg %p126
        %p273 = pneg %p123
        %p274 = pneg %p147
        %p275 = pneg %p144
        %p276 = pneg %p168
        %p277 = pneg %p165
        %p278 = pneg %p194
        %p279 = pneg %p191
        %s280 = sand.u32 %s181, 1
        %s281 = scalar_lea.sflag [#allocation3], %s280
        %s282 = sand.u32 %s181, 1
        %s283 = smul.addr %s282, 8
        %s284 = scalar_lea.vmem [#allocation2], %s283
        %s285 = smul.u32 2, %s21
        %s286 = ssub.s32 3, %s285
        %p287 = scmp.lt.s32.totalorder %s286, 2
        %s288 = scalar_select %p287, %s286, 2
        %s289 = smul.u32 4, %s288
        %p290 = scmp.lt.s32.totalorder %s285, 2
        %s291 = scalar_select %p290, %s285, 2
        %s292 = smul.addr %s291, 4
        %s293 = scalar_lea.vmem %s0, %s292
        %s294 = smul.u32 2, %s21
        %s295 = ssub.s32 3, %s294
        %p296 = scmp.lt.s32.totalorder %s295, 2
        %s297 = scalar_select %p296, %s295, 2
        %s298 = smul.u32 4, %s297
        %s299 = smul.u32 2, %s21
        %s300 = ssub.s32 3, %s299
        %p301 = scmp.lt.s32.totalorder %s300, 2
        %s302 = scalar_select %p301, %s300, 2
        %s303 = smul.u32 4, %s302
        %v304 = vld [vmem:[%s1] sm:$0xff]
        %v305 = vld [vmem:[%s1 + $0x8] sm:$0xff]
        %v306 = vld [vmem:[%s1 + $0x10] sm:$0xff]
        %v307 = vld [vmem:[%s1 + $0x18] sm:$0xff]
        %v308 = vld [vmem:[%s3] sm:$0xff]
        %v309 = vld [vmem:[%s3 + $0x8] sm:$0xff]
        %v310 = vld [vmem:[%s3 + $0x10] sm:$0xff]
        %v311 = vld [vmem:[%s3 + $0x18] sm:$0xff]
        %v312 = vld [vmem:[%s5] sm:$0x7]
        %v313 = vld [vmem:[%s2] sm:$0xff]
        %v314 = vld [vmem:[%s2 + $0x8] sm:$0xff]
        %v315 = vld [vmem:[%s2 + $0x10] sm:$0xff]
        %v316 = vld [vmem:[%s2 + $0x18] sm:$0xff]
        %318 = vset.pattern.permute.xlu0 0
        %319 = vperm.xlu0 %318, %v313
        %v320 = vpop.permute.xlu0 %319
        %323 = vset.pattern.permute.xlu0 0
        %324 = vperm.xlu0 %323, %v314
        %v325 = vpop.permute.xlu0 %324
        %328 = vset.pattern.permute.xlu0 0
        %329 = vperm.xlu0 %328, %v315
        %v330 = vpop.permute.xlu0 %329
        %333 = vset.pattern.permute.xlu0 0
        %334 = vperm.xlu0 %333, %v316
        %v335 = vpop.permute.xlu0 %334
        %v337 = vld [vmem:[%s4] sm:$0xff]
        %v338 = vld [vmem:[%s4 + $0x8] sm:$0xff]
        %v339 = vld [vmem:[%s4 + $0x10] sm:$0xff]
        %v340 = vld [vmem:[%s4 + $0x18] sm:$0xff]
        %342 = vset.pattern.permute.xlu0 0
        %343 = vperm.xlu0 %342, %v337
        %v344 = vpop.permute.xlu0 %343
        %347 = vset.pattern.permute.xlu0 0
        %348 = vperm.xlu0 %347, %v338
        %v349 = vpop.permute.xlu0 %348
        %352 = vset.pattern.permute.xlu0 0
        %353 = vperm.xlu0 %352, %v339
        %v354 = vpop.permute.xlu0 %353
        %357 = vset.pattern.permute.xlu0 0
        %358 = vperm.xlu0 %357, %v340
        %v359 = vpop.permute.xlu0 %358
        %v361 = vld [vmem:[%s6] sm:$0x7]
        %363 = vset.pattern.permute.xlu0 0
        %364 = vperm.xlu0 %363, %v361
        %v365 = vpop.permute.xlu0 %364
        %v367 = vld [vmem:[%s293] sm:$0x77]
        %369 = vst [vmem:[#allocation1] ss:$2 sm:$0xff] %v367
        %v370 = vld.sshfl [vmem:[#allocation1] sm:$0xff pattern:$0x75316420]
        %v371 = vld.sshfl [vmem:[#allocation1 + $0x8] sm:$0xff pattern:$0x75316420]
        %vm372 = vcmask 23552
        %v374 = vsel %vm372, %v304, 0
        %v377 = vsel %vm372, %v305, 0
        %v380 = vsel %vm372, %v306, 0
        %v383 = vsel %vm372, %v307, 0
        %vm385 = vcmask 1042432
        %v386 = vsel %vm385, %v370, 0
        %v388 = vsel %vm385, %v371, 0
        %390 = vmatpush.msra.mxu0 0.0
        %391 = vmatpush.msra.mxu0 0.0
        %392 = vmatpush.msra.mxu0 0.0
        %393 = vmatpush.msra.mxu0 0.0
        %394 = vmatpush.msra.mxu0 0.0
        %395 = vmatpush.msra.mxu0 0.0
        %396 = vmatpush.msra.mxu0 0.0
        %397 = vmatpush.msra.mxu0 0.0
        %398 = vmatpush.msra.mxu0 0.0
        %399 = vmatpush.msra.mxu0 0.0
        %400 = vmatpush.msra.mxu0 0.0
        %401 = vmatpush.msra.mxu0 0.0
        %402 = vmatpush.msra.mxu0 0.0
        %403 = vmatpush.msra.mxu0 0.0
        %404 = vmatpush.msra.mxu0 0.0
        %405 = vmatpush.msra.mxu0 %v386
        %406 = vmatmul.f32.gmra.mxu0 %v374
        %v407 = vpop.f32.mrf.mxu0
        %v408 = vadd.f32 %v320, %v407
        %409 = vmatmul.f32.gmra.mxu0 %v377
        %v410 = vpop.f32.mrf.mxu0
        %v411 = vadd.f32 %v325, %v410
        %412 = vmatmul.f32.gmra.mxu0 %v380
        %v413 = vpop.f32.mrf.mxu0
        %v414 = vadd.f32 %v330, %v413
        %415 = vmatmul.f32.gmra.mxu0 %v383
        %v416 = vpop.f32.mrf.mxu0
        %v417 = vadd.f32 %v335, %v416
        %418 = vdwg.mxu0
        %419 = vmatpush.msra.mxu0 0.0
        %420 = vmatpush.msra.mxu0 0.0
        %421 = vmatpush.msra.mxu0 0.0
        %422 = vmatpush.msra.mxu0 0.0
        %423 = vmatpush.msra.mxu0 0.0
        %424 = vmatpush.msra.mxu0 0.0
        %425 = vmatpush.msra.mxu0 0.0
        %426 = vmatpush.msra.mxu0 0.0
        %427 = vmatpush.msra.mxu0 0.0
        %428 = vmatpush.msra.mxu0 0.0
        %429 = vmatpush.msra.mxu0 0.0
        %430 = vmatpush.msra.mxu0 0.0
        %431 = vmatpush.msra.mxu0 0.0
        %432 = vmatpush.msra.mxu0 0.0
        %433 = vmatpush.msra.mxu0 0.0
        %434 = vmatpush.msra.mxu0 %v388
        %435 = vmatmul.f32.gmra.mxu0 %v374
        %v436 = vpop.f32.mrf.mxu0
        %v437 = vadd.f32 %v320, %v436
        %438 = vmatmul.f32.gmra.mxu0 %v377
        %v439 = vpop.f32.mrf.mxu0
        %v440 = vadd.f32 %v325, %v439
        %441 = vmatmul.f32.gmra.mxu0 %v380
        %v442 = vpop.f32.mrf.mxu0
        %v443 = vadd.f32 %v330, %v442
        %444 = vmatmul.f32.gmra.mxu0 %v383
        %v445 = vpop.f32.mrf.mxu0
        %v446 = vadd.f32 %v335, %v445
        %447 = vdwg.mxu0
        %v448 = vmax.f32 %v408, 0.0
        %v449 = vmax.f32 %v437, 0.0
        %v450 = vmax.f32 %v411, 0.0
        %v451 = vmax.f32 %v440, 0.0
        %v452 = vmax.f32 %v414, 0.0
        %v453 = vmax.f32 %v443, 0.0
        %v454 = vmax.f32 %v417, 0.0
        %v455 = vmax.f32 %v446, 0.0
        %vm456 = vcmask 261120
        %v458 = vsel %vm456, %v308, 0
        %v461 = vsel %vm456, %v309, 0
        %v464 = vsel %vm456, %v310, 0
        %v467 = vsel %vm456, %v311, 0
        %469 = vmatpush.msra.mxu0 0.0
        %470 = vmatpush.msra.mxu0 0.0
        %471 = vmatpush.msra.mxu0 0.0
        %472 = vmatpush.msra.mxu0 0.0
        %473 = vmatpush.msra.mxu0 0.0
        %474 = vmatpush.msra.mxu0 0.0
        %475 = vmatpush.msra.mxu0 0.0
        %476 = vmatpush.msra.mxu0 0.0
        %477 = vmatpush.msra.mxu0 0.0
        %478 = vmatpush.msra.mxu0 0.0
        %479 = vmatpush.msra.mxu0 0.0
        %480 = vmatpush.msra.mxu0 0.0
        %481 = vmatpush.msra.mxu0 %v454
        %482 = vmatpush.msra.mxu0 %v452
        %483 = vmatpush.msra.mxu0 %v450
        %484 = vmatpush.msra.mxu0 %v448
        %485 = vmatmul.f32.gmra.mxu0 %v458
        %v486 = vpop.f32.mrf.mxu0
        %v487 = vadd.f32 %v344, %v486
        %488 = vmatmul.f32.gmra.mxu0 %v461
        %v489 = vpop.f32.mrf.mxu0
        %v490 = vadd.f32 %v349, %v489
        %491 = vmatmul.f32.gmra.mxu0 %v464
        %v492 = vpop.f32.mrf.mxu0
        %v493 = vadd.f32 %v354, %v492
        %494 = vmatmul.f32.gmra.mxu0 %v467
        %v495 = vpop.f32.mrf.mxu0
        %v496 = vadd.f32 %v359, %v495
        %497 = vdwg.mxu0
        %498 = vmatpush.msra.mxu0 0.0
        %499 = vmatpush.msra.mxu0 0.0
        %500 = vmatpush.msra.mxu0 0.0
        %501 = vmatpush.msra.mxu0 0.0
        %502 = vmatpush.msra.mxu0 0.0
        %503 = vmatpush.msra.mxu0 0.0
        %504 = vmatpush.msra.mxu0 0.0
        %505 = vmatpush.msra.mxu0 0.0
        %506 = vmatpush.msra.mxu0 0.0
        %507 = vmatpush.msra.mxu0 0.0
        %508 = vmatpush.msra.mxu0 0.0
        %509 = vmatpush.msra.mxu0 0.0
        %510 = vmatpush.msra.mxu0 %v455
        %511 = vmatpush.msra.mxu0 %v453
        %512 = vmatpush.msra.mxu0 %v451
        %513 = vmatpush.msra.mxu0 %v449
        %514 = vmatmul.f32.gmra.mxu0 %v458
        %v515 = vpop.f32.mrf.mxu0
        %v516 = vadd.f32 %v344, %v515
        %517 = vmatmul.f32.gmra.mxu0 %v461
        %v518 = vpop.f32.mrf.mxu0
        %v519 = vadd.f32 %v349, %v518
        %520 = vmatmul.f32.gmra.mxu0 %v464
        %v521 = vpop.f32.mrf.mxu0
        %v522 = vadd.f32 %v354, %v521
        %523 = vmatmul.f32.gmra.mxu0 %v467
        %v524 = vpop.f32.mrf.mxu0
        %v525 = vadd.f32 %v359, %v524
        %526 = vdwg.mxu0
        %v527 = vmax.f32 %v487, 0.0
        %v528 = vmax.f32 %v516, 0.0
        %v529 = vmax.f32 %v490, 0.0
        %v530 = vmax.f32 %v519, 0.0
        %v531 = vmax.f32 %v493, 0.0
        %v532 = vmax.f32 %v522, 0.0
        %v533 = vmax.f32 %v496, 0.0
        %v534 = vmax.f32 %v525, 0.0
        %v536 = vsel %vm456, %v312, 0
        %538 = vmatpush.msra.mxu0 0.0
        %539 = vmatpush.msra.mxu0 0.0
        %540 = vmatpush.msra.mxu0 0.0
        %541 = vmatpush.msra.mxu0 0.0
        %542 = vmatpush.msra.mxu0 0.0
        %543 = vmatpush.msra.mxu0 0.0
        %544 = vmatpush.msra.mxu0 0.0
        %545 = vmatpush.msra.mxu0 0.0
        %546 = vmatpush.msra.mxu0 0.0
        %547 = vmatpush.msra.mxu0 0.0
        %548 = vmatpush.msra.mxu0 0.0
        %549 = vmatpush.msra.mxu0 0.0
        %550 = vmatpush.msra.mxu0 %v533
        %551 = vmatpush.msra.mxu0 %v531
        %552 = vmatpush.msra.mxu0 %v529
        %553 = vmatpush.msra.mxu0 %v527
        %554 = vmatmul.f32.gmra.mxu0 %v536
        %v555 = vpop.f32.mrf.mxu0
        %v556 = vadd.f32 %v365, %v555
        %557 = vdwg.mxu0
        %558 = vmatpush.msra.mxu0 0.0
        %559 = vmatpush.msra.mxu0 0.0
        %560 = vmatpush.msra.mxu0 0.0
        %561 = vmatpush.msra.mxu0 0.0
        %562 = vmatpush.msra.mxu0 0.0
        %563 = vmatpush.msra.mxu0 0.0
        %564 = vmatpush.msra.mxu0 0.0
        %565 = vmatpush.msra.mxu0 0.0
        %566 = vmatpush.msra.mxu0 0.0
        %567 = vmatpush.msra.mxu0 0.0
        %568 = vmatpush.msra.mxu0 0.0
        %569 = vmatpush.msra.mxu0 0.0
        %570 = vmatpush.msra.mxu0 %v534
        %571 = vmatpush.msra.mxu0 %v532
        %572 = vmatpush.msra.mxu0 %v530
        %573 = vmatpush.msra.mxu0 %v528
        %574 = vmatmul.f32.gmra.mxu0 %v536
        %v575 = vpop.f32.mrf.mxu0
        %v576 = vadd.f32 %v365, %v575
        %577 = vdwg.mxu0
        %v578 = vtanh.pop %v556
        %v579 = vtanh.pop %v576
        %v582 = vrot.slane %v579, 4
        %vm583 = vcmask 1043456
        %v584 = vsel %vm583, %v578, %v582
        %586 = vst [vmem:[%s284] sm:$0x77] %v584
        %s587 = sand.u32 %s181, 1
        %s588 = scalar_lea.sflag [#allocation3], %s587
        %s589 = sand.u32 %s181, 1
        %s590 = smul.addr %s589, 8
        %s591 = scalar_lea.vmem [#allocation2], %s590
        // Predicated region
        $region49: #{displacement_network_forward.1} parent=47 // pred_check
          %p592 = pneg %p191
        $region50: #{displacement_network_forward.1} parent=47 // pred_check_branch
          %594 = sbr.rel (%p592) target = $region52
        $region51: #{displacement_network_forward.1} parent=47 // pred_region
          %s595 = smul.u32 2, %s21
          %s596 = ssub.s32 3, %s595
          %p597 = scmp.lt.s32.totalorder %s596, 2
          %s598 = scalar_select %p597, %s596, 2
          %s599 = smul.u32 4, %s598
          %s600 = ssub.s32 8, %s599
          %s601 = sshll.u32 %s600, 4
          %602 = vsyncadd %s588, %s601
          %p603 = scmp.ne.s32.totalorder 0, %s599
          %s604 = smul.addr %s595, 4
          %s605 = scalar_lea.hbm %s7, %s604
          %s606 = smul.u32 %s598, 4
          %s607 = sshll.u32 %s606, 4
          %s608 = sshll.u32 %s591, 4
          %s609 = int_to_ptr.vmem [resolvable:$true] %s608
          %s610 = sshll.u32 %s605, 4
          %s611 = int_to_ptr.hbm [resolvable:$true] %s610
          %613 = dma.vmem_to_hbm [thread:$0]  (%p603), %s609, %s607, %s611, %s588
        $region52: #{displacement_network_forward.1} parent=47 // pred_fallthru
          _
      $region48: #{displacement_network_forward.1} parent=5 // pred_fallthru
        _
      %p614 = scmp.le.s32.totalorder 2, %s16
      // Predicated region
      $region53: #{displacement_network_forward.1} parent=5 // pred_check
        %p615 = pneg %p614
      $region54: #{displacement_network_forward.1} parent=5 // pred_check_branch
        %617 = sbr.rel (%p615) target = $region56
      $region55: #{displacement_network_forward.1} parent=5 // pred_region
        %s618 = ssub.s32 %s16, 2
        // Predicated region
        $region57: #{displacement_network_forward.1} parent=55 // pred_check
          %p619 = pneg %p197
        $region58: #{displacement_network_forward.1} parent=55 // pred_check_branch
          %621 = sbr.rel (%p619) target = $region60
        $region59: #{displacement_network_forward.1} parent=55 // pred_region
          %s622 = sand.u32 %s182, 1
          %s623 = scalar_lea.sflag [#allocation3], %s622
          %s624 = sand.u32 %s182, 1
          %s625 = smul.addr %s624, 8
          %s626 = scalar_lea.vmem [#allocation2], %s625
          %628 = dma.done %s623, 128
        $region60: #{displacement_network_forward.1} parent=55 // pred_fallthru
          _
      $region56: #{displacement_network_forward.1} parent=5 // pred_fallthru
        _
    $region6: #{displacement_network_forward.1} parent=1 // loop_footer
      %s20 = sadd.s32 1, %s16
    $region7: #{displacement_network_forward.1} parent=1 // loop_footer_branch
      %15 = sbr.rel target = $region3
    $region8: #{displacement_network_forward.1} parent=1 // loop_exit
      _
    %629 = vsyncpa [#allocation3], 1
    %s630 = scalar_lea.sflag [#allocation3], 1
    %631 = vsyncpa %s630, 1

</llo_original>
